<compile_context>
chip_gen: v6e
topology: v6e:2x2x1
jax: 0.10.0
libtpu: 0.0.40
codegen_flags: <defaults>
</compile_context>

<pallas_src>
import functools

import jax
import jax.numpy as jnp
from jax.experimental import pallas as pl
from jax.experimental.pallas import tpu as pltpu


def _round_up(n, m):
    return ((n + m - 1) // m) * m


def _cdiv(a, b):
    return (a + b - 1) // b


def _linear_kernel(x_ref, w_ref, b_ref, o_ref, *, d_total, block_k):
    """One (batch-tile, K-tile) step of logits = x @ W.T + b.

    x_ref : (block_b, block_k) f32   activation K-tile (last K tile may
                                     over-read past D -> masked below)
    w_ref : (Nsub, block_k)    bf16  weight K-tile, natural (out, in) layout
    b_ref : (1, Nsub)          f32   bias
    o_ref : (block_b, Nsub)    f32   logits; VMEM-resident across the K axis
                                     (constant index_map) -> accumulate here.
    """
    k = pl.program_id(1)

    @pl.when(k == 0)
    def _():
        o_ref[...] = jnp.broadcast_to(b_ref[...], o_ref.shape)

    x = x_ref[...]
    if d_total % block_k != 0:
        # Ragged K tail: zero lanes past D so the zero-padded weight never
        # meets garbage from the over-read region (NaN * 0 poison).
        valid = d_total - k * block_k
        col = jax.lax.broadcasted_iota(jnp.int32, x.shape, 1)
        x = jnp.where(col < valid, x, 0.0)
    x = x.astype(jnp.bfloat16)  # per-tile VPU cast; hides under weight DMA

    # x @ W.T : contract the K (last) dims of both operands, f32 accumulate.
    o_ref[...] += jax.lax.dot_general(
        x,
        w_ref[...],
        dimension_numbers=(((1,), (1,)), ((), ())),
        preferred_element_type=jnp.float32,
    )


def _pick_block_b(B, block_k, nsub):
    """Largest batch tile (<=256, multiple of 8, dividing B) whose
    double-buffered f32 x tile + bf16 weight tile stay under ~24 MiB VMEM."""
    budget = 24 * 1024 * 1024 - 2 * nsub * block_k * 2  # minus w double-buffer
    cap = max(8, budget // (2 * block_k * 4))            # f32 x rows, 2 buffers
    cap = min(cap, 256)
    if B <= cap:
        return B
    bb = (cap // 8) * 8
    while bb > 8 and B % bb:
        bb -= 8
    return bb if B % bb == 0 else B


@functools.partial(jax.jit, static_argnames=("num_classes", "block_k"))
def algorithm_predict(x, w_pad, b_pad, *, num_classes, block_k):
    """logits = flatten(x) @ weight.T + bias   (nn.Linear semantics).

    x     : (B, C, H, W) f32 (NCHW, like the PyTorch module)
    w_pad : (Nsub, Dp)   bf16  natural-layout, zero-padded classifier weight
    b_pad : (1, Nsub)    f32   zero-padded bias
    """
    B = x.shape[0]
    D = 1
    for s in x.shape[1:]:
        D *= int(s)
    Nsub, Dp = w_pad.shape
    n_k = Dp // block_k

    x2d = x.reshape(B, D)  # layout-only; no cast/pad pass over x (hot path)

    block_b = _pick_block_b(B, block_k, Nsub)
    n_b = B // block_b

    kernel = functools.partial(_linear_kernel, d_total=D, block_k=block_k)

    out = pl.pallas_call(
        kernel,
        out_shape=jax.ShapeDtypeStruct((B, Nsub), jnp.float32),
        grid=(n_b, n_k),
        in_specs=[
            pl.BlockSpec((block_b, block_k), lambda b, k: (b, k)),
            pl.BlockSpec((Nsub, block_k), lambda b, k: (0, k)),
            pl.BlockSpec((1, Nsub), lambda b, k: (0, 0)),
        ],
        out_specs=pl.BlockSpec((block_b, Nsub), lambda b, k: (b, 0)),
        compiler_params=pltpu.CompilerParams(
            dimension_semantics=("parallel", "arbitrary"),
            vmem_limit_bytes=32 * 1024 * 1024,
        ),
        cost_estimate=pl.CostEstimate(
            flops=2 * B * D * num_classes,
            transcendentals=0,
            bytes_accessed=B * D * 4 + Nsub * Dp * 2 + B * Nsub * 4 + Nsub * 4,
        ),
    )(x2d, w_pad, b_pad)

    return out[:, :num_classes]


class AlgorithmPallas:
    """Minimal JAX/Pallas stand-in for domainbed Algorithm (ERM predict)."""

    def __init__(self, input_shape, num_classes, num_domains, hparams, key,
                 block_k=65536):
        self.input_shape = input_shape  # (C, H, W)
        self.num_classes = num_classes
        self.num_domains = num_domains
        self.hparams = hparams

        C, H, W = input_shape
        D = C * H * W
        k_w, k_b = jax.random.split(key)
        # Deterministic init, nn.Linear-style uniform(-1/sqrt(D), 1/sqrt(D)).
        bound = 1.0 / float(D) ** 0.5
        self.weight = jax.random.uniform(
            k_w, (num_classes, D), jnp.float32, -bound, bound
        )
        self.bias = jax.random.uniform(
            k_b, (num_classes,), jnp.float32, -bound, bound
        )

        # --- cached, hoisted out of the hot path -------------------------
        # K tile: big enough to amortize per-grid-step overhead (>=2 MiB of
        # streamed weight per step at the default), multiple of 128, clamped
        # for small D.
        Dp128 = _round_up(D, 128)
        bk = min(block_k, Dp128)
        self.block_k = max(128, (bk // 128) * 128)
        n_k = _cdiv(D, self.block_k)
        Dp = n_k * self.block_k                 # weight columns (zero tail)
        Nsub = _round_up(num_classes, 16)       # bf16 native sublane packing

        # Natural (out_features, in_features) layout — no transpose, only
        # sublane padding (16 rows) and a zero K tail up to Dp.
        self.w_pad = (
            jnp.zeros((Nsub, Dp), jnp.bfloat16)
            .at[:num_classes, :D]
            .set(self.weight.astype(jnp.bfloat16))
        )
        self.b_pad = (
            jnp.zeros((1, Nsub), jnp.float32)
            .at[0, :num_classes]
            .set(self.bias)
        )

    def predict(self, x):
        return algorithm_predict(
            x,
            self.w_pad,
            self.b_pad,
            num_classes=self.num_classes,
            block_k=self.block_k,
        )

    def forward(self, x):
        return self.predict(x)

    __call__ = forward


if __name__ == "__main__":
    key = jax.random.PRNGKey(0)
    k_x, k_params = jax.random.split(key)

    # Small shapes consistent with the module: NCHW input.
    B, C, H, W = 2, 4, 16, 16
    num_classes = 7
    num_domains = 3
    hparams = {"lr": 1e-3, "weight_decay": 0.0, "optimizer": "adam"}

    x = jax.random.normal(k_x, (B, C, H, W), jnp.float32)

    # block_k=384 -> 3 K-tiles over D=1024 with a ragged tail, so the bias
    # init, the K accumulation and the in-kernel tail mask are all exercised.
    algo = AlgorithmPallas(
        (C, H, W), num_classes, num_domains, hparams, k_params, block_k=384
    )
    logits = algo(x)
    logits = jax.block_until_ready(logits)

    # Reference 1: same bf16-rounded inputs, f32 math (tight tolerance).
    x2d = x.reshape(B, -1)
    w_bf = algo.weight.astype(jnp.bfloat16).astype(jnp.float32)
    x_bf = x2d.astype(jnp.bfloat16).astype(jnp.float32)
    ref_bf = x_bf @ w_bf.T + algo.bias
    # Reference 2: full f32 math (loose tolerance; bf16 streaming loses bits).
    ref_f32 = x2d @ algo.weight.T + algo.bias

    assert logits.shape == (B, num_classes)
    assert jnp.allclose(logits, ref_bf, atol=2e-3, rtol=2e-3)
    assert jnp.allclose(logits, ref_f32, atol=5e-2, rtol=5e-2)

    print("KERNEL_OK")
</pallas_src>

<mosaic_0001>
module attributes {stable_mosaic.version = 11 : i64} {
  func.func @_linear_kernel(%arg0: i32, %arg1: i32, %arg2: memref<2x384xf32, #tpu.memory_space<vmem>>, %arg3: memref<16x384xbf16, #tpu.memory_space<vmem>>, %arg4: memref<1x16xf32, #tpu.memory_space<vmem>>, %arg5: memref<2x16xf32, #tpu.memory_space<vmem>>) attributes {dimension_semantics = [#tpu.dimension_semantics<parallel>, #tpu.dimension_semantics<arbitrary>], iteration_bounds = array<i64: 1, 3>, scalar_prefetch = 0 : i64, scratch_operands = 0 : i64, tpu.core_type = #tpu.core_type<tc>, window_params = [{transform_indices = @transform_0, window_bounds = array<i64: 2, 384>}, {transform_indices = @transform_1, window_bounds = array<i64: 16, 384>}, {pipeline_mode = #tpu.pipeline_mode<synchronous>, transform_indices = @transform_2, window_bounds = array<i64: 1, 16>}, {transform_indices = @transform_3, window_bounds = array<i64: 2, 16>}]} {
    %c0_i32 = arith.constant 0 : i32
    %0 = arith.cmpi eq, %arg1, %c0_i32 : i32
    %1 = arith.extui %0 : i1 to i32
    %c0_i32_0 = arith.constant 0 : i32
    %2 = arith.cmpi ne, %1, %c0_i32_0 : i32
    scf.if %2 {
      %c0_9 = arith.constant 0 : index
      %c0_10 = arith.constant 0 : index
      %17 = vector.load %arg4[%c0_9, %c0_10] : memref<1x16xf32, #tpu.memory_space<vmem>>, vector<1x16xf32>
      %18 = vector.shape_cast %17 : vector<1x16xf32> to vector<1x16xf32>
      %19 = vector.broadcast %18 : vector<1x16xf32> to vector<2x16xf32>
      %c0_11 = arith.constant 0 : index
      %c0_12 = arith.constant 0 : index
      %20 = vector.load %arg5[%c0_11, %c0_12] : memref<2x16xf32, #tpu.memory_space<vmem>>, vector<2x16xf32>
      tpu.vector_store %arg5[%c0_11, %c0_12], %19 {strides = array<i32>} : memref<2x16xf32, #tpu.memory_space<vmem>>, vector<2x16xf32>,
    } else {
    }
    %c0 = arith.constant 0 : index
    %c0_1 = arith.constant 0 : index
    %3 = vector.load %arg2[%c0, %c0_1] : memref<2x384xf32, #tpu.memory_space<vmem>>, vector<2x384xf32>
    %c384_i32 = arith.constant 384 : i32
    %4 = arith.muli %arg1, %c384_i32 : i32
    %c1024_i32 = arith.constant 1024 : i32
    %5 = arith.subi %c1024_i32, %4 : i32
    %6 = tpu.iota {dimensions = array<i32: 1>} : vector<2x384xi32>
    %7 = vector.broadcast %5 : i32 to vector<2x384xi32>
    %8 = arith.cmpi slt, %6, %7 : vector<2x384xi32>
    %cst = arith.constant 0.000000e+00 : f32
    %9 = vector.broadcast %cst : f32 to vector<2x384xf32>
    %10 = arith.select %8, %3, %9 : vector<2x384xi1>, vector<2x384xf32>
    %11 = arith.truncf %10 : vector<2x384xf32> to vector<2x384xbf16>
    %c0_2 = arith.constant 0 : index
    %c0_3 = arith.constant 0 : index
    %12 = vector.load %arg5[%c0_2, %c0_3] : memref<2x16xf32, #tpu.memory_space<vmem>>, vector<2x16xf32>
    %c0_4 = arith.constant 0 : index
    %c0_5 = arith.constant 0 : index
    %13 = vector.load %arg3[%c0_4, %c0_5] : memref<16x384xbf16, #tpu.memory_space<vmem>>, vector<16x384xbf16>
    %cst_6 = arith.constant dense<0.000000e+00> : vector<2x16xf32>
    %14 = tpu.matmul %11, %13, %cst_6 {dimension_numbers = #tpu.dot_dimension_numbers<[1], [1], [0], [0], [0, 0, 1, 0], [], []>} : vector<2x384xbf16>, vector<16x384xbf16>, vector<2x16xf32> -> vector<2x16xf32>
    %15 = arith.addf %12, %14 : vector<2x16xf32>
    %c0_7 = arith.constant 0 : index
    %c0_8 = arith.constant 0 : index
    %16 = vector.load %arg5[%c0_7, %c0_8] : memref<2x16xf32, #tpu.memory_space<vmem>>, vector<2x16xf32>
    tpu.vector_store %arg5[%c0_7, %c0_8], %15 {strides = array<i32>} : memref<2x16xf32, #tpu.memory_space<vmem>>, vector<2x16xf32>,
    return
  }
  func.func @transform_0(%arg0: i32, %arg1: i32) -> (i32, i32) {
    %c0_i32 = arith.constant 0 : i32
    return %arg0, %arg1 : i32, i32
  }
  func.func @transform_1(%arg0: i32, %arg1: i32) -> (i32, i32) {
    %c0_i32 = arith.constant 0 : i32
    %c0_i32_0 = arith.constant 0 : i32
    return %c0_i32, %arg1 : i32, i32
  }
  func.func @transform_2(%arg0: i32, %arg1: i32) -> (i32, i32) {
    %c0_i32 = arith.constant 0 : i32
    %c0_i32_0 = arith.constant 0 : i32
    %c0_i32_1 = arith.constant 0 : i32
    return %c0_i32, %c0_i32_0 : i32, i32
  }
  func.func @transform_3(%arg0: i32, %arg1: i32) -> (i32, i32) {
    %c0_i32 = arith.constant 0 : i32
    %c0_i32_0 = arith.constant 0 : i32
    return %arg0, %c0_i32 : i32, i32
  }
}

</mosaic_0001>

<llo_original>
// kernel: algorithm_predict.1
$region0: #{algorithm_predict.1}
  #allocation0 [shape = 'u32[]', space=smem, size = 0x4, offset = 0x4, fixed_abs, tag = 'smem constant byte address 0x4 - core index']
  #allocation1 [shape = 'u32[144,128]{1,0:T(1,128)}', space=vmem, size = 0x12000, scoped, tag = 'internal scratch']
  %s0 = inlined_call_operand.vmem [shape: f32[2,1024], index: 0, kind: input, shape index: {}]
  %s1 = inlined_call_operand.vmem [shape: bf16[16,1152], index: 1, kind: input, shape index: {}]
  %s2 = inlined_call_operand.vmem [shape: f32[1,16], index: 2, kind: input, shape index: {}]
  %s3 = inlined_call_operand.hbm [shape: f32[2,16], index: 3, kind: output, shape index: {}]
  %s4 = sld [smem:[#allocation0]]
  $region75: #{algorithm_predict.1} parent=0
    _
  %s6 = ssub.s32 1, %s4
  %s7 = scalar_select 0, %s6, %s4
  $region1: #{algorithm_predict.1} parent=0
    #allocation2 [shape = 'u8[24576]{0}', space=vmem, size = 0x6000, scoped, tag = 'input window, operand 1']
    #allocation3 [shape = 'u8[1024]{0}', space=vmem, size = 0x400, scoped, tag = 'output window, operand 0, single buffered']
    #allocation4 [shape = 's32[2]{0}', space=sflag, size = 0x8, scoped, tag = 'scoped memory for algorithm_predict.1']
    %8 = vsyncpa [#allocation4], 0
    loop: start=0, step=1, limit=5
    $region2: #{algorithm_predict.1} parent=1 // loop_pre_header
      _
    $region3: #{algorithm_predict.1} parent=1 // loop_header
      %s10 = sphi 0, %s14
      %p11 = scmp.ge.s32.totalorder %s10, 5
      %s17 = sphi 0, %s29
      %s18 = sphi 0, %s25
      %s19 = sphi 0, %s17
      %s20 = sphi 0, %s18
      %s21 = sphi 0, %s19
      %s22 = sphi 0, %s20
      %s34 = sphi 0, %s36
      %s37 = sphi 0, %s34
      %s38 = sphi 0, %s37
      %s54 = sphi 0, %s38
      %s60 = sphi 0, %s62
      %s63 = sphi 0, %s60
      %s64 = sphi 0, %s63
      %s80 = sphi 0, %s64
      %s84 = sphi 0, %s84
      %s86 = sphi 0, %s84
      %s87 = sphi 0, %s86
      %s101 = sphi 0, %s87
      %s107 = sphi 0, %s109
      %s110 = sphi 0, %s107
      %s111 = sphi 0, %s110
      %s127 = sphi 0, %s111
    $region4: #{algorithm_predict.1} parent=1 // loop_header_branch
      %13 = sbr.rel (%p11) target = $region8
    $region5: #{algorithm_predict.1} parent=1 // loop_body
      %s15 = ssub.s32 %s10, 1
      %s16 = ssub.s32 %s10, 2
      %s23 = sadd.s32 1, %s18
      %p24 = scmp.ge.s32.totalorder %s23, 3
      %s25 = scalar_select %p24, 0, %s23
      %s26 = sadd.s32 1, %s17
      %s27 = scalar_select %p24, %s26, %s17
      %p28 = scmp.ge.s32.totalorder %s27, 1
      %s29 = scalar_select %p28, 0, %s27
      %s30 = ssub.s32 %s17, %s29
      %s31 = ssub.s32 %s18, %s25
      %s32 = sor.u32 %s30, %s31
      %p33 = scmp.eq.s32.totalorder %s32, 0
      %s35 = sadd.s32 %s34, 1
      %s36 = scalar_select %p33, %s34, %s35
      %p39 = pneg %p33
      %p40 = scmp.eq.s32.totalorder %s10, 2
      %p41 = por %p39, %p40
      %p42 = scmp.ne.s32.totalorder %s34, %s37
      %p43 = scmp.eq.s32.totalorder %s10, 0
      %p44 = por %p42, %p43
      %p45 = scmp.ne.s32.totalorder %s34, %s37
      %p46 = scmp.eq.s32.totalorder %s15, 2
      %p47 = por %p45, %p46
      %p48 = scmp.ne.s32.totalorder %s37, %s38
      %p49 = scmp.eq.s32.totalorder %s15, 0
      %p50 = por %p48, %p49
      %p51 = scmp.ne.s32.totalorder %s37, %s38
      %p52 = scmp.eq.s32.totalorder %s16, 2
      %p53 = por %p51, %p52
      %p55 = scmp.ne.s32.totalorder %s38, %s54
      %p56 = scmp.eq.s32.totalorder %s16, 0
      %p57 = por %p55, %p56
      %s58 = ssub.s32 %s18, %s25
      %p59 = scmp.eq.s32.totalorder %s58, 0
      %s61 = sadd.s32 %s60, 1
      %s62 = scalar_select %p59, %s60, %s61
      %p65 = pneg %p59
      %p66 = scmp.eq.s32.totalorder %s10, 2
      %p67 = por %p65, %p66
      %p68 = scmp.ne.s32.totalorder %s60, %s63
      %p69 = scmp.eq.s32.totalorder %s10, 0
      %p70 = por %p68, %p69
      %p71 = scmp.ne.s32.totalorder %s60, %s63
      %p72 = scmp.eq.s32.totalorder %s15, 2
      %p73 = por %p71, %p72
      %p74 = scmp.ne.s32.totalorder %s63, %s64
      %p75 = scmp.eq.s32.totalorder %s15, 0
      %p76 = por %p74, %p75
      %p77 = scmp.ne.s32.totalorder %s63, %s64
      %p78 = scmp.eq.s32.totalorder %s16, 2
      %p79 = por %p77, %p78
      %p81 = scmp.ne.s32.totalorder %s64, %s80
      %p82 = scmp.eq.s32.totalorder %s16, 0
      %p83 = por %p81, %p82
      %s85 = sadd.s32 %s84, 1
      %p88 = scmp.eq.s32.totalorder %s10, 2
      %p89 = scmp.ne.s32.totalorder %s84, %s86
      %p90 = scmp.eq.s32.totalorder %s10, 0
      %p91 = por %p89, %p90
      %p92 = scmp.ne.s32.totalorder %s84, %s86
      %p93 = scmp.eq.s32.totalorder %s15, 2
      %p94 = por %p92, %p93
      %p95 = scmp.ne.s32.totalorder %s86, %s87
      %p96 = scmp.eq.s32.totalorder %s15, 0
      %p97 = por %p95, %p96
      %p98 = scmp.ne.s32.totalorder %s86, %s87
      %p99 = scmp.eq.s32.totalorder %s16, 2
      %p100 = por %p98, %p99
      %p102 = scmp.ne.s32.totalorder %s87, %s101
      %p103 = scmp.eq.s32.totalorder %s16, 0
      %p104 = por %p102, %p103
      %s105 = ssub.s32 %s17, %s29
      %p106 = scmp.eq.s32.totalorder %s105, 0
      %s108 = sadd.s32 %s107, 1
      %s109 = scalar_select %p106, %s107, %s108
      %p112 = pneg %p106
      %p113 = scmp.eq.s32.totalorder %s10, 2
      %p114 = por %p112, %p113
      %p115 = scmp.ne.s32.totalorder %s107, %s110
      %p116 = scmp.eq.s32.totalorder %s10, 0
      %p117 = por %p115, %p116
      %p118 = scmp.ne.s32.totalorder %s107, %s110
      %p119 = scmp.eq.s32.totalorder %s15, 2
      %p120 = por %p118, %p119
      %p121 = scmp.ne.s32.totalorder %s110, %s111
      %p122 = scmp.eq.s32.totalorder %s15, 0
      %p123 = por %p121, %p122
      %p124 = scmp.ne.s32.totalorder %s110, %s111
      %p125 = scmp.eq.s32.totalorder %s16, 2
      %p126 = por %p124, %p125
      %p128 = scmp.ne.s32.totalorder %s111, %s127
      %p129 = scmp.eq.s32.totalorder %s16, 0
      %p130 = por %p128, %p129
      %p131 = scmp.le.s32.totalorder 1, %s10
      %p132 = scmp.lt.s32.totalorder %s10, 4
      %p133 = pnand %p131, %p132
      %p134 = pneg %p133
      // Predicated region
      $region9: #{algorithm_predict.1} parent=5 // pred_check
        _
      $region10: #{algorithm_predict.1} parent=5 // pred_check_branch
        %136 = sbr.rel (%p133) target = $region12
      $region11: #{algorithm_predict.1} parent=5 // pred_region
        %s137 = ssub.s32 %s10, 1
        // Predicated region
        $region13: #{algorithm_predict.1} parent=11 // pred_check
          %p138 = pneg %p97
        $region14: #{algorithm_predict.1} parent=11 // pred_check_branch
          %140 = sbr.rel (%p138) target = $region16
        $region15: #{algorithm_predict.1} parent=11 // pred_region
          _
        $region16: #{algorithm_predict.1} parent=11 // pred_fallthru
          _
      $region12: #{algorithm_predict.1} parent=5 // pred_fallthru
        _
      %p141 = scmp.lt.s32.totalorder %s10, 3
      // Predicated region
      $region17: #{algorithm_predict.1} parent=5 // pred_check
        %p142 = pneg %p141
      $region18: #{algorithm_predict.1} parent=5 // pred_check_branch
        %144 = sbr.rel (%p142) target = $region20
      $region19: #{algorithm_predict.1} parent=5 // pred_region
        // Predicated region
        $region21: #{algorithm_predict.1} parent=19 // pred_check
          %p145 = pneg %p44
        $region22: #{algorithm_predict.1} parent=19 // pred_check_branch
          %147 = sbr.rel (%p145) target = $region24
        $region23: #{algorithm_predict.1} parent=19 // pred_region
          %s148 = smul.u32 3, %s18
          %s149 = ssub.s32 8, %s148
          %p150 = scmp.lt.s32.totalorder %s149, 3
          %s151 = scalar_select %p150, %s149, 3
          %s152 = smul.u32 32, %s151
          %p153 = scmp.lt.s32.totalorder %s17, 0
          %s154 = scalar_select %p153, %s17, 0
          %p155 = scmp.lt.s32.totalorder %s148, 7
          %s156 = scalar_select %p155, %s148, 7
          %s157 = smul.addr %s154, 8
          %s158 = sadd.s32 %s156, %s157
          %s159 = smul.addr %s158, 2
          %s160 = scalar_lea.vmem %s0, %s159
          %s161 = smul.u32 3, %s18
          %s162 = ssub.s32 8, %s161
          %p163 = scmp.lt.s32.totalorder %s162, 3
          %s164 = scalar_select %p163, %s162, 3
          %s165 = smul.u32 32, %s164
        $region24: #{algorithm_predict.1} parent=19 // pred_fallthru
          _
        // Predicated region
        $region25: #{algorithm_predict.1} parent=19 // pred_check
          %p166 = pneg %p70
        $region26: #{algorithm_predict.1} parent=19 // pred_check_branch
          %168 = sbr.rel (%p166) target = $region28
        $region27: #{algorithm_predict.1} parent=19 // pred_region
          %s169 = sand.u32 %s60, 1
          %s170 = sand.u32 %s60, 1
          %s171 = smul.addr %s170, 24
          %s172 = scalar_lea.vmem [#allocation2], %s171
          %s173 = smul.u32 3, %s18
          %s174 = smul.addr %s173, 4
          %s175 = scalar_lea.vmem %s1, %s174
          // Predicated region
          $region29: #{algorithm_predict.1} parent=27 // pred_check
            _
          $region30: #{algorithm_predict.1} parent=27 // pred_check_branch
            %177 = sbr.rel (0) target = $region32
          $region31: #{algorithm_predict.1} parent=27 // pred_region
            // Predicated region
            $region33: #{algorithm_predict.1} parent=31 // pred_check
              _
            $region34: #{algorithm_predict.1} parent=31 // pred_check_branch
              %179 = sbr.rel (0) target = $region36
            $region35: #{algorithm_predict.1} parent=31 // pred_region
              %s180 = scalar_lea.vmem %s175, 8
              %s181 = scalar_lea.vmem %s172, 8 [#allocation2]
              loop: start=0, step=1, limit=1
              $region37: #{algorithm_predict.1} parent=35 // loop_pre_header
                _
              $region38: #{algorithm_predict.1} parent=35 // loop_header
                %s183 = sphi 0, %s187
                %p184 = scmp.ge.s32.totalorder %s183, 1
                %s188 = sphi %s175, %s175
                %s189 = sphi %s172, %s172
              $region39: #{algorithm_predict.1} parent=35 // loop_header_branch
                %186 = sbr.rel (%p184) target = $region43
              $region40: #{algorithm_predict.1} parent=35 // loop_body
                %v190 = vld [vmem:[%s188] sm:$0xff]
                %191 = vst [vmem:[%s189] sm:$0xff] %v190
                %v192 = vld [vmem:[%s188 + $0x24] sm:$0xff]
                %193 = vst [vmem:[%s189 + $0xc] sm:$0xff] %v192
              $region41: #{algorithm_predict.1} parent=35 // loop_footer
                %s187 = sadd.s32 1, %s183
              $region42: #{algorithm_predict.1} parent=35 // loop_footer_branch
                %182 = sbr.rel target = $region38
              $region43: #{algorithm_predict.1} parent=35 // loop_exit
                _
              %s195 = ssub.s32 16, 1
              loop: start=0, step=1, limit=1
              $region44: #{algorithm_predict.1} parent=35 // loop_pre_header
                _
              $region45: #{algorithm_predict.1} parent=35 // loop_header
                %s197 = sphi 0, %s201
                %p198 = scmp.ge.s32.totalorder %s197, 1
                %s202 = sphi %s180, %s180
                %s203 = sphi %s181, %s181
              $region46: #{algorithm_predict.1} parent=35 // loop_header_branch
                %200 = sbr.rel (%p198) target = $region50
              $region47: #{algorithm_predict.1} parent=35 // loop_body
                %v204 = vld [vmem:[%s202] sm:%s195]
                %205 = vst [vmem:[%s203] sm:%s195] %v204
                %v206 = vld [vmem:[%s202 + $0x24] sm:%s195]
                %207 = vst [vmem:[%s203 + $0xc] sm:%s195] %v206
              $region48: #{algorithm_predict.1} parent=35 // loop_footer
                %s201 = sadd.s32 1, %s197
              $region49: #{algorithm_predict.1} parent=35 // loop_footer_branch
                %196 = sbr.rel target = $region45
              $region50: #{algorithm_predict.1} parent=35 // loop_exit
                _
            $region36: #{algorithm_predict.1} parent=31 // pred_fallthru
              _
          $region32: #{algorithm_predict.1} parent=27 // pred_fallthru
            _
          %208 = vnop
        $region28: #{algorithm_predict.1} parent=19 // pred_fallthru
          _
      $region20: #{algorithm_predict.1} parent=5 // pred_fallthru
        _
      %p209 = scmp.le.s32.totalorder 1, %s10
      %p210 = scmp.lt.s32.totalorder %s10, 4
      %p211 = pnand %p209, %p210
      %p212 = pneg %p211
      // Predicated region
      $region51: #{algorithm_predict.1} parent=5 // pred_check
        _
      $region52: #{algorithm_predict.1} parent=5 // pred_check_branch
        %214 = sbr.rel (%p211) target = $region54
      $region53: #{algorithm_predict.1} parent=5 // pred_region
        %s215 = ssub.s32 %s10, 1
        %s216 = sand.u32 %s63, 1
        %s217 = sand.u32 %s63, 1
        %s218 = smul.addr %s217, 24
        %s219 = scalar_lea.vmem [#allocation2], %s218
        // Predicated region
        $region55: #{algorithm_predict.1} parent=53 // pred_check
          %p220 = pneg %p76
        $region56: #{algorithm_predict.1} parent=53 // pred_check_branch
          %222 = sbr.rel (%p220) target = $region58
        $region57: #{algorithm_predict.1} parent=53 // pred_region
          _
        $region58: #{algorithm_predict.1} parent=53 // pred_fallthru
          _
        %s223 = smul.u32 3, %s20
        %s224 = ssub.s32 8, %s223
        %p225 = scmp.lt.s32.totalorder %s224, 3
        %s226 = scalar_select %p225, %s224, 3
        %s227 = smul.u32 32, %s226
        %p228 = scmp.lt.s32.totalorder %s19, 0
        %s229 = scalar_select %p228, %s19, 0
        %p230 = scmp.lt.s32.totalorder %s223, 7
        %s231 = scalar_select %p230, %s223, 7
        %s232 = smul.addr %s229, 8
        %s233 = sadd.s32 %s231, %s232
        %s234 = smul.addr %s233, 2
        %s235 = scalar_lea.vmem %s0, %s234
        %p236 = pneg %p50
        %p237 = pneg %p47
        %s238 = sand.u32 %s63, 1
        %s239 = sand.u32 %s63, 1
        %s240 = smul.addr %s239, 24
        %s241 = scalar_lea.vmem [#allocation2], %s240
        %p242 = pneg %p76
        %p243 = pneg %p73
        %p244 = pneg %p97
        %p245 = pneg %p94
        %p246 = pneg %p123
        %p247 = pneg %p120
        %s248 = smul.u32 3, %s20
        %s249 = ssub.s32 8, %s248
        %p250 = scmp.lt.s32.totalorder %s249, 3
        %s251 = scalar_select %p250, %s249, 3
        %s252 = smul.u32 32, %s251
        %p253 = scmp.lt.s32.totalorder %s19, 0
        %s254 = scalar_select %p253, %s19, 0
        %p255 = scmp.lt.s32.totalorder %s248, 7
        %s256 = scalar_select %p255, %s248, 7
        %s257 = smul.addr %s254, 8
        %s258 = sadd.s32 %s256, %s257
        %s259 = smul.addr %s258, 2
        %s260 = scalar_lea.vmem %s0, %s259
        %s261 = smul.u32 3, %s20
        %s262 = ssub.s32 8, %s261
        %p263 = scmp.lt.s32.totalorder %s262, 3
        %s264 = scalar_select %p263, %s262, 3
        %s265 = smul.u32 32, %s264
        %s266 = smul.u32 3, %s20
        %p268 = scmp.eq.s32.totalorder %s20, 0
        // Predicated region
        $region59: #{algorithm_predict.1} parent=53 // pred_check
          %p269 = pneg %p268
        $region60: #{algorithm_predict.1} parent=53 // pred_check_branch
          %271 = sbr.rel (%p269) target = $region62
        $region61: #{algorithm_predict.1} parent=53 // pred_region
          %v272 = vld [vmem:[%s2] sm:$0x1]
          %v274 = vlaneseq
          %v275 = vshrl.u32 %v274, 7
          %v276 = vsub.s32 0, %v275
          %v277 = vrot.slane %v272, %v276
          %vm279 = vcmask 123904
          %280 = vst.msk [vmem:[#allocation3] sm:$0x3] %vm279, %v277
        $region62: #{algorithm_predict.1} parent=53 // pred_fallthru
          _
        %v281 = vld [vmem:[%s260] sm:$0x3f]
        %s282 = smul.u32 %s20, 384
        %s283 = ssub.s32 1024, %s282
        %v284 = vlaneseq
        %v285 = vand.u32 %v284, 127
        %v286 = vadd.s32 %v285, 128
        %v287 = vadd.s32 %v285, 256
        %v288 = vstv %s283
        %vm289 = vcmp.lt.s32.totalorder %v285, %v288
        %vm290 = vcmp.lt.s32.totalorder %v286, %v288
        %vm291 = vcmp.lt.s32.totalorder %v287, %v288
        %v293 = vcombine.high %v281, %v281
        %v295 = vunpack.c.l.s4 1983009808
        %v296 = vunpack.c.0.s8 %v295
        %v297 = vlaneseq
        %v298 = vshrl.u32 %v297, 7
        %v299 = vsub.s32 %v296, %v298
        %v300 = vrot.slane %v281, %v299
        %v302 = vunpack.c.l.s4 1983009808
        %v303 = vunpack.c.0.s8 %v302
        %v304 = vlaneseq
        %v305 = vshrl.u32 %v304, 7
        %v306 = vsub.s32 %v303, %v305
        %v307 = vrot.slane %v293, %v306
        %v308 = vcombine.high %v300, %v300
        %v312 = vsel %vm289, %v300, 0.0
        %v313 = vsel %vm290, %v308, 0.0
        %v314 = vsel %vm291, %v307, 0.0
        %v315 = vpack.c.bf16 %v312, %v312
        %v316 = vpack.c.bf16 %v313, %v313
        %v317 = vpack.c.bf16 %v314, %v314
        %v318 = vld [vmem:[#allocation3] sm:$0x3]
        %v319 = vld [vmem:[%s219] sm:$0xff]
        %v320 = vld [vmem:[%s219 + $0x8] sm:$0xf]
        %v321 = vld [vmem:[%s219 + $0xc] sm:$0xff]
        %v322 = vld [vmem:[%s219 + $0x14] sm:$0xf]
        %v327 = vunpack.c.l.b16 %v319
        %v328 = vunpack.c.h.b16 %v319
        %v329 = vunpack.c.l.b16 %v320
        %v330 = vunpack.c.l.b16 %v321
        %v331 = vunpack.c.h.b16 %v321
        %v332 = vunpack.c.l.b16 %v322
        %v333 = vpack.c.b16 %v330, %v327
        %v334 = vpack.c.b16 %v331, %v328
        %v335 = vpack.c.b16 %v332, %v329
        %339 = vmatprep.subr.bf16.mxu0 0
        %340 = vmatpush1.bf16.xpose.msra.mxu0 0
        %341 = vmatprep.subr.bf16.mxu0 0
        %342 = vmatpush1.bf16.xpose.msra.mxu0 0
        %343 = vmatprep.subr.bf16.mxu0 0
        %344 = vmatpush1.bf16.xpose.msra.mxu0 0
        %345 = vmatprep.subr.bf16.mxu0 0
        %346 = vmatpush1.bf16.xpose.msra.mxu0 0
        %347 = vmatprep.subr.bf16.mxu0 0
        %348 = vmatpush1.bf16.xpose.msra.mxu0 0
        %349 = vmatprep.subr.bf16.mxu0 0
        %350 = vmatpush1.bf16.xpose.msra.mxu0 0
        %351 = vmatprep.subr.bf16.mxu0 0
        %352 = vmatpush1.bf16.xpose.msra.mxu0 0
        %353 = vmatprep.subr.bf16.mxu0 %v334
        %354 = vmatpush1.bf16.xpose.msra.mxu0 %v333
        %355 = vmatprep.subr.bf16.mxu0 0
        %356 = vmatpush2.bf16.xpose.msra.mxu0 0
        %357 = vmatprep.subr.bf16.mxu0 0
        %358 = vmatpush2.bf16.xpose.msra.mxu0 0
        %359 = vmatprep.subr.bf16.mxu0 0
        %360 = vmatpush2.bf16.xpose.msra.mxu0 0
        %361 = vmatprep.subr.bf16.mxu0 0
        %362 = vmatpush2.bf16.xpose.msra.mxu0 0
        %363 = vmatprep.subr.bf16.mxu0 0
        %364 = vmatpush2.bf16.xpose.msra.mxu0 0
        %365 = vmatprep.subr.bf16.mxu0 0
        %366 = vmatpush2.bf16.xpose.msra.mxu0 0
        %367 = vmatprep.subr.bf16.mxu0 0
        %368 = vmatpush2.bf16.xpose.msra.mxu0 0
        %369 = vmatprep.subr.bf16.mxu0 0
        %370 = vmatpush2.bf16.xpose.msra.mxu0 0
        %371 = vmatprep.mubr.bf16.mxu0 %v316
        %372 = vmatmul.mubr.bf16.gmra.mxu0 %v315
        %v373 = vpop.f32.mrf.mxu0
        %v374 = vadd.f32 0.0, %v373
        %v375 = vpop.f32.mrf.mxu0
        %v376 = vpop.f32.mrf.mxu0
        %v377 = vpop.f32.mrf.mxu0
        %378 = vdwg.mxu0
        %379 = vmatprep.subr.bf16.mxu0 0
        %380 = vmatpush1.bf16.xpose.msra.mxu0 0
        %381 = vmatprep.subr.bf16.mxu0 0
        %382 = vmatpush1.bf16.xpose.msra.mxu0 0
        %383 = vmatprep.subr.bf16.mxu0 0
        %384 = vmatpush1.bf16.xpose.msra.mxu0 0
        %385 = vmatprep.subr.bf16.mxu0 0
        %386 = vmatpush1.bf16.xpose.msra.mxu0 0
        %387 = vmatprep.subr.bf16.mxu0 0
        %388 = vmatpush1.bf16.xpose.msra.mxu0 0
        %389 = vmatprep.subr.bf16.mxu0 0
        %390 = vmatpush1.bf16.xpose.msra.mxu0 0
        %391 = vmatprep.subr.bf16.mxu0 0
        %392 = vmatpush1.bf16.xpose.msra.mxu0 0
        %393 = vmatprep.subr.bf16.mxu0 0
        %394 = vmatpush1.bf16.xpose.msra.mxu0 %v335
        %395 = vmatprep.subr.bf16.mxu0 0
        %396 = vmatpush2.bf16.xpose.msra.mxu0 0
        %397 = vmatprep.subr.bf16.mxu0 0
        %398 = vmatpush2.bf16.xpose.msra.mxu0 0
        %399 = vmatprep.subr.bf16.mxu0 0
        %400 = vmatpush2.bf16.xpose.msra.mxu0 0
        %401 = vmatprep.subr.bf16.mxu0 0
        %402 = vmatpush2.bf16.xpose.msra.mxu0 0
        %403 = vmatprep.subr.bf16.mxu0 0
        %404 = vmatpush2.bf16.xpose.msra.mxu0 0
        %405 = vmatprep.subr.bf16.mxu0 0
        %406 = vmatpush2.bf16.xpose.msra.mxu0 0
        %407 = vmatprep.subr.bf16.mxu0 0
        %408 = vmatpush2.bf16.xpose.msra.mxu0 0
        %409 = vmatprep.subr.bf16.mxu0 0
        %410 = vmatpush2.bf16.xpose.msra.mxu0 0
        %411 = vmatprep.mubr.bf16.mxu0 0
        %412 = vmatmul.mubr.bf16.gmra.mxu0 %v317
        %v413 = vpop.f32.mrf.mxu0
        %v414 = vadd.f32 %v374, %v413
        %v415 = vpop.f32.mrf.mxu0
        %v416 = vpop.f32.mrf.mxu0
        %v417 = vpop.f32.mrf.mxu0
        %418 = vdwg.mxu0
        %v419 = vadd.f32 %v318, %v414
        %vm420 = vcmask 123904
        %421 = vst.msk [vmem:[#allocation3] sm:$0x3] %vm420, %v419
        // Predicated region
        $region63: #{algorithm_predict.1} parent=53 // pred_check
          %p422 = pneg %p120
        $region64: #{algorithm_predict.1} parent=53 // pred_check_branch
          %424 = sbr.rel (%p422) target = $region66
        $region65: #{algorithm_predict.1} parent=53 // pred_region
          %s426 = ssub.s32 32, 32
          %427 = vsyncadd [#allocation4], %s426
          %s428 = smul.addr %s19, 32
          %s429 = scalar_lea.hbm %s3, %s428
          %s431 = sshll.u32 [#allocation3], 4
          %s432 = int_to_ptr.vmem [resolvable:$true] %s431
          %434 = dma.vmem_to_hbm [thread:$0]  %s432, 32, %s429, [#allocation4]
        $region66: #{algorithm_predict.1} parent=53 // pred_fallthru
          _
        // Predicated region
        $region67: #{algorithm_predict.1} parent=53 // pred_check
          %p435 = pneg %p120
        $region68: #{algorithm_predict.1} parent=53 // pred_check_branch
          %437 = sbr.rel (%p435) target = $region70
        $region69: #{algorithm_predict.1} parent=53 // pred_region
          %438 = dma.done [#allocation4], 32
        $region70: #{algorithm_predict.1} parent=53 // pred_fallthru
          _
      $region54: #{algorithm_predict.1} parent=5 // pred_fallthru
        _
      %p439 = scmp.le.s32.totalorder 2, %s10
      // Predicated region
      $region71: #{algorithm_predict.1} parent=5 // pred_check
        %p440 = pneg %p439
      $region72: #{algorithm_predict.1} parent=5 // pred_check_branch
        %442 = sbr.rel (%p440) target = $region74
      $region73: #{algorithm_predict.1} parent=5 // pred_region
        %s443 = ssub.s32 %s10, 2
      $region74: #{algorithm_predict.1} parent=5 // pred_fallthru
        _
    $region6: #{algorithm_predict.1} parent=1 // loop_footer
      %s14 = sadd.s32 1, %s10
    $region7: #{algorithm_predict.1} parent=1 // loop_footer_branch
      %9 = sbr.rel target = $region3
    $region8: #{algorithm_predict.1} parent=1 // loop_exit
      _
    %444 = vsyncpa [#allocation4], 1
    %s445 = scalar_lea.sflag [#allocation4], 1
    %446 = vsyncpa %s445, 1

</llo_original>
